<compile_context>
chip_gen: v7x
topology: tpu7x:2x2x1
jax: 0.10.0
libtpu: 0.0.40
codegen_flags: <defaults>
</compile_context>

<pallas_src>
import jax
import jax.numpy as jnp
from jax.experimental import pallas as pl
from jax.experimental.pallas import tpu as pltpu


# ----------------------------- Pallas kernel --------------------------------
def _make_kernel(*, K, TL, L, identity_shortcut):
    """Builds the fused BasicBlock kernel for a fixed tap count / tile size."""
    pad = (K - 1) // 2
    W2 = TL + 2 * pad          # width of the h1 intermediate (output tile + halo)

    def _body(x_ref, w1_ref, b1_ref, w2_ref, b2_ref, o_ref, ws_ref, sb_ref):
        t = pl.program_id(1)                       # L-tile index
        xw = x_ref[...]                            # (Cin, TL + 4*pad) bf16

        # ---- conv1 (BN1 scale pre-folded into w1) as ONE im2col matmul -----
        # (Cmid, K*Cin) @ (K*Cin, W2)
        xcol = jnp.concatenate([xw[:, k:k + W2] for k in range(K)], axis=0)
        h1 = jnp.dot(w1_ref[...], xcol, preferred_element_type=jnp.float32)
        h1 = jnp.maximum(h1 + b1_ref[...], 0.0)    # BN1 bias + ReLU (f32)

        # Zero the halo columns that fall outside [0, L): this reproduces the
        # zero padding conv2 would see on the full-length h1 (edge tiles only;
        # interior tiles keep real neighbouring values).
        q = t * TL - pad + jax.lax.broadcasted_iota(jnp.int32, h1.shape, 1)
        h1 = jnp.where((q >= 0) & (q < L), h1, 0.0)
        h1b = h1.astype(jnp.bfloat16)

        # ---- conv2 (BN2 scale pre-folded into w2) as ONE im2col matmul -----
        # (Cout, K*Cmid) @ (K*Cmid, TL)
        h1col = jnp.concatenate([h1b[:, k:k + TL] for k in range(K)], axis=0)
        h2 = jnp.dot(w2_ref[...], h1col, preferred_element_type=jnp.float32)
        h2 = h2 + b2_ref[...]                                    # BN2 bias (f32)

        # ---- shortcut -------------------------------------------------------
        xs = xw[:, 2 * pad:2 * pad + TL]                         # (Cin, TL)
        if identity_shortcut:
            sc = xs.astype(jnp.float32)                          # plain add
        else:
            # 1x1 conv (BNs scale pre-folded) + bias
            sc = jnp.dot(ws_ref[...], xs, preferred_element_type=jnp.float32)
            sc = sc + sb_ref[...]

        o_ref[...] = jnp.maximum(h2 + sc, 0.0).astype(o_ref.dtype)

    if identity_shortcut:
        def kernel(x_ref, w1_ref, b1_ref, w2_ref, b2_ref, o_ref):
            _body(x_ref, w1_ref, b1_ref, w2_ref, b2_ref, o_ref, None, None)
    else:
        def kernel(x_ref, w1_ref, b1_ref, w2_ref, b2_ref, ws_ref, sb_ref, o_ref):
            _body(x_ref, w1_ref, b1_ref, w2_ref, b2_ref, o_ref, ws_ref, sb_ref)
    return kernel


def _fold_bn(gamma, beta, mean, var, eps=1e-5):
    scale = gamma / jnp.sqrt(var + eps)
    bias = beta - mean * scale
    return scale, bias


# ------------------------------- wrapper -------------------------------------
def basic_block_forward(x_ncl, params, tile_len=None):
    """x_ncl: (B, Cin, L) PyTorch NCL layout.  Returns (B, Cout, L) float32."""
    x = jnp.asarray(x_ncl)
    B, Cin, L = x.shape
    w1 = jnp.asarray(params["w1"], jnp.float32)          # (K, Cin, Cmid)
    w2 = jnp.asarray(params["w2"], jnp.float32)          # (K, Cmid, Cout)
    K, _, Cmid = w1.shape
    Cout = w2.shape[2]
    pad = (K - 1) // 2

    # L tiling (halo of 2*pad per side: conv1 needs pad, conv2 another pad).
    if tile_len is None:
        TL = L if L <= 1024 else 1024
    else:
        TL = min(int(tile_len), L)
    NT = (L + TL - 1) // TL
    if NT > 1 and TL % 128 != 0:
        raise ValueError("tile_len must be a multiple of 128 when it tiles L")
    Lt = NT * TL
    W1 = TL + 4 * pad

    # Host side: zero-pad the sequence edges and lay out the overlapping
    # per-tile halo windows, fused with the f32->bf16 cast (one pass over x).
    xpad = jnp.pad(x.astype(jnp.float32),
                   ((0, 0), (0, 0), (2 * pad, Lt - L + 2 * pad)))
    idx = (jnp.arange(NT) * TL)[:, None] + jnp.arange(W1)[None, :]    # (NT, W1)
    xwin = jnp.transpose(xpad[:, :, idx], (0, 2, 1, 3)).astype(jnp.bfloat16)

    # Fold BN scales into the conv weights (f32) then lay out for im2col:
    # row index = k*Cin + c, so each conv is one matmul.
    s1, b1 = _fold_bn(*params["bn1"])
    s2, b2 = _fold_bn(*params["bn2"])
    w1c = jnp.transpose((w1 * s1[None, None, :]).reshape(K * Cin, Cmid)
                        ).astype(jnp.bfloat16)            # (Cmid, K*Cin)
    w2c = jnp.transpose((w2 * s2[None, None, :]).reshape(K * Cmid, Cout)
                        ).astype(jnp.bfloat16)            # (Cout, K*Cmid)
    col = lambda v: jnp.asarray(v, jnp.float32).reshape(-1, 1)

    identity_shortcut = params.get("ws") is None
    inputs = [xwin, w1c, col(b1), w2c, col(b2)]
    in_specs = [
        pl.BlockSpec((None, None, Cin, W1), lambda b, t: (b, t, 0, 0)),   # x window
        pl.BlockSpec((Cmid, K * Cin), lambda b, t: (0, 0)),               # w1 (im2col, BN1-folded)
        pl.BlockSpec((Cmid, 1), lambda b, t: (0, 0)),                     # bn1 bias
        pl.BlockSpec((Cout, K * Cmid), lambda b, t: (0, 0)),              # w2 (im2col, BN2-folded)
        pl.BlockSpec((Cout, 1), lambda b, t: (0, 0)),                     # bn2 bias
    ]
    if identity_shortcut:
        assert Cin == Cout, "identity shortcut requires Cin == Cout"
    else:
        ws = jnp.asarray(params["ws"], jnp.float32)                       # (Cin, Cout)
        ss, sb = _fold_bn(*params["bns"])
        wsc = jnp.transpose(ws * ss[None, :]).astype(jnp.bfloat16)        # (Cout, Cin)
        inputs += [wsc, col(sb)]
        in_specs += [
            pl.BlockSpec((Cout, Cin), lambda b, t: (0, 0)),               # shortcut w (BN-folded)
            pl.BlockSpec((Cout, 1), lambda b, t: (0, 0)),                 # bns bias
        ]

    kernel = _make_kernel(K=K, TL=TL, L=L, identity_shortcut=identity_shortcut)

    out = pl.pallas_call(
        kernel,
        out_shape=jax.ShapeDtypeStruct((B, Cout, Lt), jnp.float32),
        grid_spec=pltpu.PrefetchScalarGridSpec(
            num_scalar_prefetch=0,
            grid=(B, NT),
            in_specs=in_specs,
            out_specs=pl.BlockSpec((None, Cout, TL), lambda b, t: (b, 0, t)),
        ),
        compiler_params=pltpu.CompilerParams(
            dimension_semantics=("parallel", "parallel")),
    )(*inputs)

    return out if Lt == L else out[:, :, :L]


# ---------------------------- pure-JAX reference -----------------------------
def reference_forward(x_ncl, params):
    def conv1d(x, w_kio, pad):
        w = jnp.transpose(w_kio, (2, 1, 0))                    # (Cout, Cin, K)
        return jax.lax.conv_general_dilated(
            x, w, window_strides=(1,), padding=[(pad, pad)],
            dimension_numbers=("NCH", "OIH", "NCH"))

    def bn(x, gamma, beta, mean, var, eps=1e-5):
        return ((x - mean[None, :, None])
                / jnp.sqrt(var[None, :, None] + eps)
                * gamma[None, :, None] + beta[None, :, None])

    K = params["w1"].shape[0]
    pad = (K - 1) // 2
    h = jax.nn.relu(bn(conv1d(x_ncl, params["w1"], pad), *params["bn1"]))
    h = bn(conv1d(h, params["w2"], pad), *params["bn2"])
    if params["ws"] is None:
        sc = x_ncl
    else:
        sc = bn(conv1d(x_ncl, params["ws"][None, :, :], 0), *params["bns"])
    return jax.nn.relu(h + sc)


# ----------------------------------- test ------------------------------------
if __name__ == "__main__":
    root = jax.random.PRNGKey(0)

    def bn_params(key, c):
        k = jax.random.split(key, 4)
        gamma = 1.0 + 0.1 * jax.random.normal(k[0], (c,), jnp.float32)
        beta = 0.1 * jax.random.normal(k[1], (c,), jnp.float32)
        mean = 0.1 * jax.random.normal(k[2], (c,), jnp.float32)
        var = 1.0 + 0.1 * jax.random.uniform(k[3], (c,), jnp.float32)
        return (gamma, beta, mean, var)

    def make_params(key, Cin, Cout, K, with_sc_conv):
        ks = jax.random.split(key, 6)
        return {
            "w1": 0.1 * jax.random.normal(ks[0], (K, Cin, Cout), jnp.float32),
            "bn1": bn_params(ks[1], Cout),
            "w2": 0.1 * jax.random.normal(ks[2], (K, Cout, Cout), jnp.float32),
            "bn2": bn_params(ks[3], Cout),
            "ws": (0.1 * jax.random.normal(ks[4], (Cin, Cout), jnp.float32)
                   if with_sc_conv else None),
            "bns": bn_params(ks[5], Cout) if with_sc_conv else None,
        }

    #           B  Cin Cout  L   K  tile  conv-shortcut?
    configs = [(2,  4,   8, 16,  3, None, True),    # Cin != Cout -> 1x1 conv shortcut
               (2,  8,   8, 16,  3, None, False),   # identity shortcut
               (1,  4,   8, 300, 3, 128,  True)]    # multi-tile path (halo + mask)

    for (B, Cin, Cout, L, K, TL, with_sc) in configs:
        kx, kp = jax.random.split(jax.random.fold_in(root, 13 * L + Cin), 2)
        params = make_params(kp, Cin, Cout, K, with_sc)
        x = jax.random.normal(kx, (B, Cin, L), jnp.float32)     # PyTorch NCL

        out = jax.block_until_ready(basic_block_forward(x, params, tile_len=TL))
        ref = reference_forward(x, params)

        assert out.shape == (B, Cout, L), out.shape
        # tolerance reflects intentional bf16 matmul operands (accumulation f32)
        assert jnp.allclose(out, ref, atol=3e-2, rtol=3e-2), (
            f"config {(B, Cin, Cout, L, K, TL, with_sc)}: "
            f"max abs err {float(jnp.max(jnp.abs(out - ref)))}")

    print("KERNEL_OK")
</pallas_src>

<mosaic_0001>
module attributes {stable_mosaic.version = 11 : i64} {
  func.func @kernel(%arg0: i32, %arg1: i32, %arg2: memref<1x1x4x20xbf16, #tpu.memory_space<vmem>>, %arg3: memref<8x12xbf16, #tpu.memory_space<vmem>>, %arg4: memref<8x1xf32, #tpu.memory_space<vmem>>, %arg5: memref<8x24xbf16, #tpu.memory_space<vmem>>, %arg6: memref<8x1xf32, #tpu.memory_space<vmem>>, %arg7: memref<8x4xbf16, #tpu.memory_space<vmem>>, %arg8: memref<8x1xf32, #tpu.memory_space<vmem>>, %arg9: memref<1x8x16xf32, #tpu.memory_space<vmem>>) attributes {dimension_semantics = [#tpu.dimension_semantics<parallel>, #tpu.dimension_semantics<parallel>], iteration_bounds = array<i64: 2, 1>, scalar_prefetch = 0 : i64, scratch_operands = 0 : i64, tpu.core_type = #tpu.core_type<tc>, window_params = [{transform_indices = @transform_0, window_bounds = array<i64: 1, 1, 4, 20>}, {pipeline_mode = #tpu.pipeline_mode<synchronous>, transform_indices = @transform_1, window_bounds = array<i64: 8, 12>}, {pipeline_mode = #tpu.pipeline_mode<synchronous>, transform_indices = @transform_2, window_bounds = array<i64: 8, 1>}, {pipeline_mode = #tpu.pipeline_mode<synchronous>, transform_indices = @transform_3, window_bounds = array<i64: 8, 24>}, {pipeline_mode = #tpu.pipeline_mode<synchronous>, transform_indices = @transform_4, window_bounds = array<i64: 8, 1>}, {pipeline_mode = #tpu.pipeline_mode<synchronous>, transform_indices = @transform_5, window_bounds = array<i64: 8, 4>}, {pipeline_mode = #tpu.pipeline_mode<synchronous>, transform_indices = @transform_6, window_bounds = array<i64: 8, 1>}, {transform_indices = @transform_7, window_bounds = array<i64: 1, 8, 16>}]} {
    %c0 = arith.constant 0 : index
    %c0_0 = arith.constant 0 : index
    %c0_1 = arith.constant 0 : index
    %c0_2 = arith.constant 0 : index
    %0 = vector.load %arg2[%c0, %c0_0, %c0_1, %c0_2] : memref<1x1x4x20xbf16, #tpu.memory_space<vmem>>, vector<1x1x4x20xbf16>
    %1 = vector.shape_cast %0 : vector<1x1x4x20xbf16> to vector<4x20xbf16>
    %2 = vector.extract_strided_slice %1 {offsets = [0, 0], sizes = [4, 18], strides = [1, 1]} : vector<4x20xbf16> to vector<4x18xbf16>
    %3 = vector.extract_strided_slice %1 {offsets = [0, 1], sizes = [4, 18], strides = [1, 1]} : vector<4x20xbf16> to vector<4x18xbf16>
    %4 = vector.extract_strided_slice %1 {offsets = [0, 2], sizes = [4, 18], strides = [1, 1]} : vector<4x20xbf16> to vector<4x18xbf16>
    %5 = tpu.concatenate %2, %3, %4 in 0 : vector<4x18xbf16>, vector<4x18xbf16>, vector<4x18xbf16> -> vector<12x18xbf16>
    %c0_3 = arith.constant 0 : index
    %c0_4 = arith.constant 0 : index
    %6 = vector.load %arg3[%c0_3, %c0_4] : memref<8x12xbf16, #tpu.memory_space<vmem>>, vector<8x12xbf16>
    %cst = arith.constant dense<0.000000e+00> : vector<8x18xf32>
    %7 = tpu.matmul %6, %5, %cst {dimension_numbers = #tpu.dot_dimension_numbers<[1], [0], [0], [1], [0, 0, 1, 1], [], []>} : vector<8x12xbf16>, vector<12x18xbf16>, vector<8x18xf32> -> vector<8x18xf32>
    %c0_5 = arith.constant 0 : index
    %c0_6 = arith.constant 0 : index
    %8 = vector.load %arg4[%c0_5, %c0_6] : memref<8x1xf32, #tpu.memory_space<vmem>>, vector<8x1xf32>
    %9 = vector.broadcast %8 : vector<8x1xf32> to vector<8x18xf32>
    %10 = arith.addf %7, %9 : vector<8x18xf32>
    %cst_7 = arith.constant 0.000000e+00 : f32
    %11 = vector.broadcast %cst_7 : f32 to vector<8x18xf32>
    %12 = arith.maximumf %10, %11 : vector<8x18xf32>
    %c16_i32 = arith.constant 16 : i32
    %13 = arith.muli %arg1, %c16_i32 : i32
    %c1_i32 = arith.constant 1 : i32
    %14 = arith.subi %13, %c1_i32 : i32
    %15 = tpu.iota {dimensions = array<i32: 1>} : vector<8x18xi32>
    %16 = vector.broadcast %14 : i32 to vector<8x18xi32>
    %17 = arith.addi %16, %15 : vector<8x18xi32>
    %c0_i32 = arith.constant 0 : i32
    %18 = vector.broadcast %c0_i32 : i32 to vector<8x18xi32>
    %19 = arith.cmpi sge, %17, %18 : vector<8x18xi32>
    %c16_i32_8 = arith.constant 16 : i32
    %20 = vector.broadcast %c16_i32_8 : i32 to vector<8x18xi32>
    %21 = arith.cmpi slt, %17, %20 : vector<8x18xi32>
    %22 = arith.andi %19, %21 : vector<8x18xi1>
    %cst_9 = arith.constant 0.000000e+00 : f32
    %23 = vector.broadcast %cst_9 : f32 to vector<8x18xf32>
    %24 = arith.select %22, %12, %23 : vector<8x18xi1>, vector<8x18xf32>
    %25 = arith.truncf %24 : vector<8x18xf32> to vector<8x18xbf16>
    %26 = vector.extract_strided_slice %25 {offsets = [0, 0], sizes = [8, 16], strides = [1, 1]} : vector<8x18xbf16> to vector<8x16xbf16>
    %27 = vector.extract_strided_slice %25 {offsets = [0, 1], sizes = [8, 16], strides = [1, 1]} : vector<8x18xbf16> to vector<8x16xbf16>
    %28 = vector.extract_strided_slice %25 {offsets = [0, 2], sizes = [8, 16], strides = [1, 1]} : vector<8x18xbf16> to vector<8x16xbf16>
    %29 = tpu.concatenate %26, %27, %28 in 0 : vector<8x16xbf16>, vector<8x16xbf16>, vector<8x16xbf16> -> vector<24x16xbf16>
    %c0_10 = arith.constant 0 : index
    %c0_11 = arith.constant 0 : index
    %30 = vector.load %arg5[%c0_10, %c0_11] : memref<8x24xbf16, #tpu.memory_space<vmem>>, vector<8x24xbf16>
    %cst_12 = arith.constant dense<0.000000e+00> : vector<8x16xf32>
    %31 = tpu.matmul %30, %29, %cst_12 {dimension_numbers = #tpu.dot_dimension_numbers<[1], [0], [0], [1], [0, 0, 1, 1], [], []>} : vector<8x24xbf16>, vector<24x16xbf16>, vector<8x16xf32> -> vector<8x16xf32>
    %c0_13 = arith.constant 0 : index
    %c0_14 = arith.constant 0 : index
    %32 = vector.load %arg6[%c0_13, %c0_14] : memref<8x1xf32, #tpu.memory_space<vmem>>, vector<8x1xf32>
    %33 = vector.broadcast %32 : vector<8x1xf32> to vector<8x16xf32>
    %34 = arith.addf %31, %33 : vector<8x16xf32>
    %35 = vector.extract_strided_slice %1 {offsets = [0, 2], sizes = [4, 16], strides = [1, 1]} : vector<4x20xbf16> to vector<4x16xbf16>
    %c0_15 = arith.constant 0 : index
    %c0_16 = arith.constant 0 : index
    %36 = vector.load %arg7[%c0_15, %c0_16] : memref<8x4xbf16, #tpu.memory_space<vmem>>, vector<8x4xbf16>
    %cst_17 = arith.constant dense<0.000000e+00> : vector<8x16xf32>
    %37 = tpu.matmul %36, %35, %cst_17 {dimension_numbers = #tpu.dot_dimension_numbers<[1], [0], [0], [1], [0, 0, 1, 1], [], []>} : vector<8x4xbf16>, vector<4x16xbf16>, vector<8x16xf32> -> vector<8x16xf32>
    %c0_18 = arith.constant 0 : index
    %c0_19 = arith.constant 0 : index
    %38 = vector.load %arg8[%c0_18, %c0_19] : memref<8x1xf32, #tpu.memory_space<vmem>>, vector<8x1xf32>
    %39 = vector.broadcast %38 : vector<8x1xf32> to vector<8x16xf32>
    %40 = arith.addf %37, %39 : vector<8x16xf32>
    %41 = arith.addf %34, %40 : vector<8x16xf32>
    %cst_20 = arith.constant 0.000000e+00 : f32
    %42 = vector.broadcast %cst_20 : f32 to vector<8x16xf32>
    %43 = arith.maximumf %41, %42 : vector<8x16xf32>
    %c0_21 = arith.constant 0 : index
    %c0_22 = arith.constant 0 : index
    %c0_23 = arith.constant 0 : index
    %44 = vector.load %arg9[%c0_21, %c0_22, %c0_23] : memref<1x8x16xf32, #tpu.memory_space<vmem>>, vector<1x8x16xf32>
    %45 = vector.shape_cast %44 : vector<1x8x16xf32> to vector<8x16xf32>
    %46 = vector.shape_cast %43 : vector<8x16xf32> to vector<1x8x16xf32>
    tpu.vector_store %arg9[%c0_21, %c0_22, %c0_23], %46 {strides = array<i32>} : memref<1x8x16xf32, #tpu.memory_space<vmem>>, vector<1x8x16xf32>,
    return
  }
  func.func @transform_0(%arg0: i32, %arg1: i32) -> (i32, i32, i32, i32) {
    %c0_i32 = arith.constant 0 : i32
    %c0_i32_0 = arith.constant 0 : i32
    %c0_i32_1 = arith.constant 0 : i32
    return %arg0, %arg1, %c0_i32, %c0_i32_0 : i32, i32, i32, i32
  }
  func.func @transform_1(%arg0: i32, %arg1: i32) -> (i32, i32) {
    %c0_i32 = arith.constant 0 : i32
    %c0_i32_0 = arith.constant 0 : i32
    %c0_i32_1 = arith.constant 0 : i32
    return %c0_i32, %c0_i32_0 : i32, i32
  }
  func.func @transform_2(%arg0: i32, %arg1: i32) -> (i32, i32) {
    %c0_i32 = arith.constant 0 : i32
    %c0_i32_0 = arith.constant 0 : i32
    %c0_i32_1 = arith.constant 0 : i32
    return %c0_i32, %c0_i32_0 : i32, i32
  }
  func.func @transform_3(%arg0: i32, %arg1: i32) -> (i32, i32) {
    %c0_i32 = arith.constant 0 : i32
    %c0_i32_0 = arith.constant 0 : i32
    %c0_i32_1 = arith.constant 0 : i32
    return %c0_i32, %c0_i32_0 : i32, i32
  }
  func.func @transform_4(%arg0: i32, %arg1: i32) -> (i32, i32) {
    %c0_i32 = arith.constant 0 : i32
    %c0_i32_0 = arith.constant 0 : i32
    %c0_i32_1 = arith.constant 0 : i32
    return %c0_i32, %c0_i32_0 : i32, i32
  }
  func.func @transform_5(%arg0: i32, %arg1: i32) -> (i32, i32) {
    %c0_i32 = arith.constant 0 : i32
    %c0_i32_0 = arith.constant 0 : i32
    %c0_i32_1 = arith.constant 0 : i32
    return %c0_i32, %c0_i32_0 : i32, i32
  }
  func.func @transform_6(%arg0: i32, %arg1: i32) -> (i32, i32) {
    %c0_i32 = arith.constant 0 : i32
    %c0_i32_0 = arith.constant 0 : i32
    %c0_i32_1 = arith.constant 0 : i32
    return %c0_i32, %c0_i32_0 : i32, i32
  }
  func.func @transform_7(%arg0: i32, %arg1: i32) -> (i32, i32, i32) {
    %c0_i32 = arith.constant 0 : i32
    %c0_i32_0 = arith.constant 0 : i32
    return %arg0, %c0_i32, %arg1 : i32, i32, i32
  }
}

</mosaic_0001>

<llo_original>
// kernel: tpu_custom_call.1
$region0: #{tpu_custom_call.1}
  #allocation0 [shape = 'u32[]', space=smem, size = 0x4, offset = 0x4, fixed_abs, tag = 'smem constant byte address 0x4 - core index']
  #allocation1 [shape = 'u32[144,128]{1,0:T(1,128)}', space=vmem, size = 0x12000, scoped, tag = 'internal scratch']
  %s0 = inlined_call_operand.vmem [shape: bf16[2,1,4,20], index: 0, kind: input, shape index: {}]
  %s1 = inlined_call_operand.vmem [shape: bf16[8,12], index: 1, kind: input, shape index: {}]
  %s2 = inlined_call_operand.vmem [shape: f32[8,1], index: 2, kind: input, shape index: {}]
  %s3 = inlined_call_operand.vmem [shape: bf16[8,24], index: 3, kind: input, shape index: {}]
  %s4 = inlined_call_operand.vmem [shape: f32[8,1], index: 4, kind: input, shape index: {}]
  %s5 = inlined_call_operand.vmem [shape: bf16[8,4], index: 5, kind: input, shape index: {}]
  %s6 = inlined_call_operand.vmem [shape: f32[8,1], index: 6, kind: input, shape index: {}]
  %s7 = inlined_call_operand.hbm [shape: f32[2,8,16], index: 7, kind: output, shape index: {}]
  %s8 = sld [smem:[#allocation0]]
  $region61: #{tpu_custom_call.1} parent=0
    _
  %s10 = ssub.s32 1, %s8
  %s11 = scalar_select 0, %s10, %s8
  $region1: #{tpu_custom_call.1} parent=0
    #allocation2 [shape = 'u8[8192]{0}', space=vmem, size = 0x2000, scoped, tag = 'output window, operand 0']
    #allocation3 [shape = 's32[2]{0}', space=sflag, size = 0x8, scoped, tag = 'scoped memory for tpu_custom_call.1']
    %12 = vsyncpa [#allocation3], 0
    %s13 = scalar_lea.sflag [#allocation3], 1
    %14 = vsyncpa %s13, 0
    loop: start=0, step=1, limit=4
    $region2: #{tpu_custom_call.1} parent=1 // loop_pre_header
      _
    $region3: #{tpu_custom_call.1} parent=1 // loop_header
      %s16 = sphi 0, %s20
      %p17 = scmp.ge.s32.totalorder %s16, 4
      %s23 = sphi 0, %s35
      %s24 = sphi 0, %s31
      %s25 = sphi 0, %s23
      %s26 = sphi 0, %s24
      %s27 = sphi 0, %s25
      %s28 = sphi 0, %s26
      %s40 = sphi 0, %s42
      %s43 = sphi 0, %s40
      %s44 = sphi 0, %s43
      %s60 = sphi 0, %s44
      %s64 = sphi 0, %s64
      %s66 = sphi 0, %s64
      %s67 = sphi 0, %s66
      %s81 = sphi 0, %s67
      %s85 = sphi 0, %s85
      %s87 = sphi 0, %s85
      %s88 = sphi 0, %s87
      %s102 = sphi 0, %s88
      %s106 = sphi 0, %s106
      %s108 = sphi 0, %s106
      %s109 = sphi 0, %s108
      %s123 = sphi 0, %s109
      %s127 = sphi 0, %s127
      %s129 = sphi 0, %s127
      %s130 = sphi 0, %s129
      %s144 = sphi 0, %s130
      %s148 = sphi 0, %s148
      %s150 = sphi 0, %s148
      %s151 = sphi 0, %s150
      %s165 = sphi 0, %s151
      %s169 = sphi 0, %s169
      %s171 = sphi 0, %s169
      %s172 = sphi 0, %s171
      %s186 = sphi 0, %s172
      %s194 = sphi 0, %s196
      %s197 = sphi 0, %s194
      %s198 = sphi 0, %s197
      %s214 = sphi 0, %s198
    $region4: #{tpu_custom_call.1} parent=1 // loop_header_branch
      %19 = sbr.rel (%p17) target = $region8
    $region5: #{tpu_custom_call.1} parent=1 // loop_body
      %s21 = ssub.s32 %s16, 1
      %s22 = ssub.s32 %s16, 2
      %s29 = sadd.s32 1, %s24
      %p30 = scmp.ge.s32.totalorder %s29, 1
      %s31 = scalar_select %p30, 0, %s29
      %s32 = sadd.s32 1, %s23
      %s33 = scalar_select %p30, %s32, %s23
      %p34 = scmp.ge.s32.totalorder %s33, 2
      %s35 = scalar_select %p34, 0, %s33
      %s36 = ssub.s32 %s23, %s35
      %s37 = ssub.s32 %s24, %s31
      %s38 = sor.u32 %s36, %s37
      %p39 = scmp.eq.s32.totalorder %s38, 0
      %s41 = sadd.s32 %s40, 1
      %s42 = scalar_select %p39, %s40, %s41
      %p45 = pneg %p39
      %p46 = scmp.eq.s32.totalorder %s16, 1
      %p47 = por %p45, %p46
      %p48 = scmp.ne.s32.totalorder %s40, %s43
      %p49 = scmp.eq.s32.totalorder %s16, 0
      %p50 = por %p48, %p49
      %p51 = scmp.ne.s32.totalorder %s40, %s43
      %p52 = scmp.eq.s32.totalorder %s21, 1
      %p53 = por %p51, %p52
      %p54 = scmp.ne.s32.totalorder %s43, %s44
      %p55 = scmp.eq.s32.totalorder %s21, 0
      %p56 = por %p54, %p55
      %p57 = scmp.ne.s32.totalorder %s43, %s44
      %p58 = scmp.eq.s32.totalorder %s22, 1
      %p59 = por %p57, %p58
      %p61 = scmp.ne.s32.totalorder %s44, %s60
      %p62 = scmp.eq.s32.totalorder %s22, 0
      %p63 = por %p61, %p62
      %s65 = sadd.s32 %s64, 1
      %p68 = scmp.eq.s32.totalorder %s16, 1
      %p69 = scmp.ne.s32.totalorder %s64, %s66
      %p70 = scmp.eq.s32.totalorder %s16, 0
      %p71 = por %p69, %p70
      %p72 = scmp.ne.s32.totalorder %s64, %s66
      %p73 = scmp.eq.s32.totalorder %s21, 1
      %p74 = por %p72, %p73
      %p75 = scmp.ne.s32.totalorder %s66, %s67
      %p76 = scmp.eq.s32.totalorder %s21, 0
      %p77 = por %p75, %p76
      %p78 = scmp.ne.s32.totalorder %s66, %s67
      %p79 = scmp.eq.s32.totalorder %s22, 1
      %p80 = por %p78, %p79
      %p82 = scmp.ne.s32.totalorder %s67, %s81
      %p83 = scmp.eq.s32.totalorder %s22, 0
      %p84 = por %p82, %p83
      %s86 = sadd.s32 %s85, 1
      %p89 = scmp.eq.s32.totalorder %s16, 1
      %p90 = scmp.ne.s32.totalorder %s85, %s87
      %p91 = scmp.eq.s32.totalorder %s16, 0
      %p92 = por %p90, %p91
      %p93 = scmp.ne.s32.totalorder %s85, %s87
      %p94 = scmp.eq.s32.totalorder %s21, 1
      %p95 = por %p93, %p94
      %p96 = scmp.ne.s32.totalorder %s87, %s88
      %p97 = scmp.eq.s32.totalorder %s21, 0
      %p98 = por %p96, %p97
      %p99 = scmp.ne.s32.totalorder %s87, %s88
      %p100 = scmp.eq.s32.totalorder %s22, 1
      %p101 = por %p99, %p100
      %p103 = scmp.ne.s32.totalorder %s88, %s102
      %p104 = scmp.eq.s32.totalorder %s22, 0
      %p105 = por %p103, %p104
      %s107 = sadd.s32 %s106, 1
      %p110 = scmp.eq.s32.totalorder %s16, 1
      %p111 = scmp.ne.s32.totalorder %s106, %s108
      %p112 = scmp.eq.s32.totalorder %s16, 0
      %p113 = por %p111, %p112
      %p114 = scmp.ne.s32.totalorder %s106, %s108
      %p115 = scmp.eq.s32.totalorder %s21, 1
      %p116 = por %p114, %p115
      %p117 = scmp.ne.s32.totalorder %s108, %s109
      %p118 = scmp.eq.s32.totalorder %s21, 0
      %p119 = por %p117, %p118
      %p120 = scmp.ne.s32.totalorder %s108, %s109
      %p121 = scmp.eq.s32.totalorder %s22, 1
      %p122 = por %p120, %p121
      %p124 = scmp.ne.s32.totalorder %s109, %s123
      %p125 = scmp.eq.s32.totalorder %s22, 0
      %p126 = por %p124, %p125
      %s128 = sadd.s32 %s127, 1
      %p131 = scmp.eq.s32.totalorder %s16, 1
      %p132 = scmp.ne.s32.totalorder %s127, %s129
      %p133 = scmp.eq.s32.totalorder %s16, 0
      %p134 = por %p132, %p133
      %p135 = scmp.ne.s32.totalorder %s127, %s129
      %p136 = scmp.eq.s32.totalorder %s21, 1
      %p137 = por %p135, %p136
      %p138 = scmp.ne.s32.totalorder %s129, %s130
      %p139 = scmp.eq.s32.totalorder %s21, 0
      %p140 = por %p138, %p139
      %p141 = scmp.ne.s32.totalorder %s129, %s130
      %p142 = scmp.eq.s32.totalorder %s22, 1
      %p143 = por %p141, %p142
      %p145 = scmp.ne.s32.totalorder %s130, %s144
      %p146 = scmp.eq.s32.totalorder %s22, 0
      %p147 = por %p145, %p146
      %s149 = sadd.s32 %s148, 1
      %p152 = scmp.eq.s32.totalorder %s16, 1
      %p153 = scmp.ne.s32.totalorder %s148, %s150
      %p154 = scmp.eq.s32.totalorder %s16, 0
      %p155 = por %p153, %p154
      %p156 = scmp.ne.s32.totalorder %s148, %s150
      %p157 = scmp.eq.s32.totalorder %s21, 1
      %p158 = por %p156, %p157
      %p159 = scmp.ne.s32.totalorder %s150, %s151
      %p160 = scmp.eq.s32.totalorder %s21, 0
      %p161 = por %p159, %p160
      %p162 = scmp.ne.s32.totalorder %s150, %s151
      %p163 = scmp.eq.s32.totalorder %s22, 1
      %p164 = por %p162, %p163
      %p166 = scmp.ne.s32.totalorder %s151, %s165
      %p167 = scmp.eq.s32.totalorder %s22, 0
      %p168 = por %p166, %p167
      %s170 = sadd.s32 %s169, 1
      %p173 = scmp.eq.s32.totalorder %s16, 1
      %p174 = scmp.ne.s32.totalorder %s169, %s171
      %p175 = scmp.eq.s32.totalorder %s16, 0
      %p176 = por %p174, %p175
      %p177 = scmp.ne.s32.totalorder %s169, %s171
      %p178 = scmp.eq.s32.totalorder %s21, 1
      %p179 = por %p177, %p178
      %p180 = scmp.ne.s32.totalorder %s171, %s172
      %p181 = scmp.eq.s32.totalorder %s21, 0
      %p182 = por %p180, %p181
      %p183 = scmp.ne.s32.totalorder %s171, %s172
      %p184 = scmp.eq.s32.totalorder %s22, 1
      %p185 = por %p183, %p184
      %p187 = scmp.ne.s32.totalorder %s172, %s186
      %p188 = scmp.eq.s32.totalorder %s22, 0
      %p189 = por %p187, %p188
      %s190 = ssub.s32 %s23, %s35
      %s191 = ssub.s32 %s24, %s31
      %s192 = sor.u32 %s190, %s191
      %p193 = scmp.eq.s32.totalorder %s192, 0
      %s195 = sadd.s32 %s194, 1
      %s196 = scalar_select %p193, %s194, %s195
      %p199 = pneg %p193
      %p200 = scmp.eq.s32.totalorder %s16, 1
      %p201 = por %p199, %p200
      %p202 = scmp.ne.s32.totalorder %s194, %s197
      %p203 = scmp.eq.s32.totalorder %s16, 0
      %p204 = por %p202, %p203
      %p205 = scmp.ne.s32.totalorder %s194, %s197
      %p206 = scmp.eq.s32.totalorder %s21, 1
      %p207 = por %p205, %p206
      %p208 = scmp.ne.s32.totalorder %s197, %s198
      %p209 = scmp.eq.s32.totalorder %s21, 0
      %p210 = por %p208, %p209
      %p211 = scmp.ne.s32.totalorder %s197, %s198
      %p212 = scmp.eq.s32.totalorder %s22, 1
      %p213 = por %p211, %p212
      %p215 = scmp.ne.s32.totalorder %s198, %s214
      %p216 = scmp.eq.s32.totalorder %s22, 0
      %p217 = por %p215, %p216
      %p218 = scmp.le.s32.totalorder 1, %s16
      %p219 = scmp.lt.s32.totalorder %s16, 3
      %p220 = pnand %p218, %p219
      %p221 = pneg %p220
      // Predicated region
      $region9: #{tpu_custom_call.1} parent=5 // pred_check
        _
      $region10: #{tpu_custom_call.1} parent=5 // pred_check_branch
        %223 = sbr.rel (%p220) target = $region12
      $region11: #{tpu_custom_call.1} parent=5 // pred_region
        %s224 = ssub.s32 %s16, 1
        // Predicated region
        $region13: #{tpu_custom_call.1} parent=11 // pred_check
          %p225 = pneg %p77
        $region14: #{tpu_custom_call.1} parent=11 // pred_check_branch
          %227 = sbr.rel (%p225) target = $region16
        $region15: #{tpu_custom_call.1} parent=11 // pred_region
          _
        $region16: #{tpu_custom_call.1} parent=11 // pred_fallthru
          _
        // Predicated region
        $region17: #{tpu_custom_call.1} parent=11 // pred_check
          %p228 = pneg %p98
        $region18: #{tpu_custom_call.1} parent=11 // pred_check_branch
          %230 = sbr.rel (%p228) target = $region20
        $region19: #{tpu_custom_call.1} parent=11 // pred_region
          _
        $region20: #{tpu_custom_call.1} parent=11 // pred_fallthru
          _
        // Predicated region
        $region21: #{tpu_custom_call.1} parent=11 // pred_check
          %p231 = pneg %p119
        $region22: #{tpu_custom_call.1} parent=11 // pred_check_branch
          %233 = sbr.rel (%p231) target = $region24
        $region23: #{tpu_custom_call.1} parent=11 // pred_region
          _
        $region24: #{tpu_custom_call.1} parent=11 // pred_fallthru
          _
        // Predicated region
        $region25: #{tpu_custom_call.1} parent=11 // pred_check
          %p234 = pneg %p140
        $region26: #{tpu_custom_call.1} parent=11 // pred_check_branch
          %236 = sbr.rel (%p234) target = $region28
        $region27: #{tpu_custom_call.1} parent=11 // pred_region
          _
        $region28: #{tpu_custom_call.1} parent=11 // pred_fallthru
          _
        // Predicated region
        $region29: #{tpu_custom_call.1} parent=11 // pred_check
          %p237 = pneg %p161
        $region30: #{tpu_custom_call.1} parent=11 // pred_check_branch
          %239 = sbr.rel (%p237) target = $region32
        $region31: #{tpu_custom_call.1} parent=11 // pred_region
          _
        $region32: #{tpu_custom_call.1} parent=11 // pred_fallthru
          _
        // Predicated region
        $region33: #{tpu_custom_call.1} parent=11 // pred_check
          %p240 = pneg %p182
        $region34: #{tpu_custom_call.1} parent=11 // pred_check_branch
          %242 = sbr.rel (%p240) target = $region36
        $region35: #{tpu_custom_call.1} parent=11 // pred_region
          _
        $region36: #{tpu_custom_call.1} parent=11 // pred_fallthru
          _
      $region12: #{tpu_custom_call.1} parent=5 // pred_fallthru
        _
      %p243 = scmp.lt.s32.totalorder %s16, 2
      // Predicated region
      $region37: #{tpu_custom_call.1} parent=5 // pred_check
        %p244 = pneg %p243
      $region38: #{tpu_custom_call.1} parent=5 // pred_check_branch
        %246 = sbr.rel (%p244) target = $region40
      $region39: #{tpu_custom_call.1} parent=5 // pred_region
        // Predicated region
        $region41: #{tpu_custom_call.1} parent=39 // pred_check
          %p247 = pneg %p50
        $region42: #{tpu_custom_call.1} parent=39 // pred_check_branch
          %249 = sbr.rel (%p247) target = $region44
        $region43: #{tpu_custom_call.1} parent=39 // pred_region
          %p250 = scmp.lt.s32.totalorder %s23, 1
          %s251 = scalar_select %p250, %s23, 1
          %p252 = scmp.lt.s32.totalorder %s24, 0
          %s253 = scalar_select %p252, %s24, 0
          %s254 = sadd.s32 %s253, %s251
          %s255 = smul.addr %s254, 2
          %s256 = scalar_lea.vmem %s0, %s255
        $region44: #{tpu_custom_call.1} parent=39 // pred_fallthru
          _
      $region40: #{tpu_custom_call.1} parent=5 // pred_fallthru
        _
      %p257 = scmp.le.s32.totalorder 1, %s16
      %p258 = scmp.lt.s32.totalorder %s16, 3
      %p259 = pnand %p257, %p258
      %p260 = pneg %p259
      // Predicated region
      $region45: #{tpu_custom_call.1} parent=5 // pred_check
        _
      $region46: #{tpu_custom_call.1} parent=5 // pred_check_branch
        %262 = sbr.rel (%p259) target = $region48
      $region47: #{tpu_custom_call.1} parent=5 // pred_region
        %s263 = ssub.s32 %s16, 1
        %p264 = scmp.lt.s32.totalorder %s25, 1
        %s265 = scalar_select %p264, %s25, 1
        %p266 = scmp.lt.s32.totalorder %s26, 0
        %s267 = scalar_select %p266, %s26, 0
        %s268 = sadd.s32 %s267, %s265
        %s269 = smul.addr %s268, 2
        %s270 = scalar_lea.vmem %s0, %s269
        %p271 = pneg %p56
        %p272 = pneg %p53
        %p273 = pneg %p77
        %p274 = pneg %p74
        %p275 = pneg %p98
        %p276 = pneg %p95
        %p277 = pneg %p119
        %p278 = pneg %p116
        %p279 = pneg %p140
        %p280 = pneg %p137
        %p281 = pneg %p161
        %p282 = pneg %p158
        %p283 = pneg %p182
        %p284 = pneg %p179
        %p285 = pneg %p210
        %p286 = pneg %p207
        %s287 = sand.u32 %s197, 1
        %s288 = scalar_lea.sflag [#allocation3], %s287
        %s289 = sand.u32 %s197, 1
        %s290 = smul.addr %s289, 8
        %s291 = scalar_lea.vmem [#allocation2], %s290
        %p292 = scmp.lt.s32.totalorder %s25, 1
        %s293 = scalar_select %p292, %s25, 1
        %p294 = scmp.lt.s32.totalorder %s26, 0
        %s295 = scalar_select %p294, %s26, 0
        %s296 = sadd.s32 %s295, %s293
        %s297 = smul.addr %s296, 2
        %s298 = scalar_lea.vmem %s0, %s297
        %v300 = vld [vmem:[%s298] sm:$0x3]
        %v302 = vcombine.low %v300, %v300
        %v304 = vunpack.c.l.s4 1983009808
        %v305 = vunpack.c.0.s8 %v304
        %v306 = vlaneseq
        %v307 = vshrl.u32 %v306, 7
        %v308 = vsub.s32 %v305, %v307
        %v309 = vrot.slane %v302, %v308
        %v311 = vunpack.c.l.s4 1983009808
        %v312 = vunpack.c.0.s8 %v311
        %v313 = vlaneseq
        %v314 = vshrl.u32 %v313, 7
        %v315 = vsub.s32 %v312, %v314
        %v316 = vrot.slane %v300, %v315
        %317 = vrot.lane.b32.xlu0 %v309, 127
        %v318 = vpop.permute.xlu0 %317
        %v319 = vcombine.low %v316, %v316
        %320 = vrot.lane.b32.xlu0 %v319, 126
        %v321 = vpop.permute.xlu0 %320
        %vm322 = vcmask 1041408
        %v325 = vsel %vm322, %v300, %v318
        %vm326 = vcmask 1043456
        %v328 = vsel %vm326, %v325, %v321
        %v329 = vld [vmem:[%s1] sm:$0xf]
        %v330 = vld [vmem:[%s2] sm:$0xff]
        %332 = vset.pattern.permute.xlu0 0
        %333 = vperm.xlu0 %332, %v330
        %v334 = vpop.permute.xlu0 %333
        %vm336 = vcmask 97280
        %v338 = vsel %vm336, %v329, 0
        %vm340 = vcmask 1045504
        %v341 = vsel %vm340, %v328, 0
        %343 = vmatprep.subr.bf16.mxu0 0
        %344 = vmatpush1.bf16.msra.mxu0 %v341
        %345 = vmatprep.subr.bf16.mxu0 0
        %346 = vmatpush1.bf16.msra.mxu0 0
        %347 = vmatprep.subr.bf16.mxu0 0
        %348 = vmatpush1.bf16.msra.mxu0 0
        %349 = vmatprep.subr.bf16.mxu0 0
        %350 = vmatpush1.bf16.msra.mxu0 0
        %351 = vmatprep.subr.bf16.mxu0 0
        %352 = vmatpush1.bf16.msra.mxu0 0
        %353 = vmatprep.subr.bf16.mxu0 0
        %354 = vmatpush1.bf16.msra.mxu0 0
        %355 = vmatprep.subr.bf16.mxu0 0
        %356 = vmatpush1.bf16.msra.mxu0 0
        %357 = vmatprep.subr.bf16.mxu0 0
        %358 = vmatpush1.bf16.msra.mxu0 0
        %359 = vmatprep.subr.bf16.mxu0 0
        %360 = vmatpush1.bf16.msra.mxu0 0
        %361 = vmatprep.subr.bf16.mxu0 0
        %362 = vmatpush1.bf16.msra.mxu0 0
        %363 = vmatprep.subr.bf16.mxu0 0
        %364 = vmatpush1.bf16.msra.mxu0 0
        %365 = vmatprep.subr.bf16.mxu0 0
        %366 = vmatpush1.bf16.msra.mxu0 0
        %367 = vmatprep.subr.bf16.mxu0 0
        %368 = vmatpush1.bf16.msra.mxu0 0
        %369 = vmatprep.subr.bf16.mxu0 0
        %370 = vmatpush1.bf16.msra.mxu0 0
        %371 = vmatprep.subr.bf16.mxu0 0
        %372 = vmatpush1.bf16.msra.mxu0 0
        %373 = vmatprep.subr.bf16.mxu0 0
        %374 = vmatpush1.bf16.msra.mxu0 0
        %375 = vmatprep.mubr.bf16.mxu0 0
        %376 = vmatmul.mubr.bf16.gmra.mrb[0].mxu0 %v338
        %v377 = vpop.f32.mrb[0].mxu0
        %v378 = vadd.f32 %v334, %v377
        %v379 = vpop.f32.mrb[0].mxu0
        %v380 = vpop.f32.mrb[0].mxu0
        %v381 = vpop.f32.mrb[0].mxu0
        %382 = vdwg.mxu0
        %v383 = vmax.f32 %v378, 0.0
        %s384 = smul.u32 %s26, 16
        %s385 = ssub.s32 %s384, 1
        %v386 = vlaneseq
        %v387 = vand.u32 %v386, 127
        %v388 = vstv %s385
        %v389 = vadd.s32 %v388, %v387
        %vm390 = vcmp.ge.s32.totalorder %v389, 0
        %vm391 = vcmp.lt.s32.totalorder %v389, 16
        %vm392 = vmand %vm390, %vm391
        %v393 = vsel %vm392, %v383, 0.0
        %v394 = vpack.c.bf16 %v393, %v393
        %v396 = vrot.slane %v394, 4
        %397 = vrot.lane.b32.xlu0 %v396, 127
        %v398 = vpop.permute.xlu0 %397
        %399 = vrot.lane.b32.xlu0 %v394, 126
        %v400 = vpop.permute.xlu0 %399
        %v403 = vsel %vm326, %v394, %v398
        %v405 = vld [vmem:[%s3] sm:$0xf]
        %v406 = vld [vmem:[%s4] sm:$0xff]
        %408 = vset.pattern.permute.xlu0 0
        %409 = vperm.xlu0 %408, %v406
        %v410 = vpop.permute.xlu0 %409
        %vm412 = vcmask 195584
        %v414 = vsel %vm412, %v405, 0
        %v417 = vsel %vm326, %v400, 0
        %419 = vmatprep.subr.bf16.mxu0 0
        %420 = vmatpush1.bf16.msra.mxu0 %v403
        %421 = vmatprep.subr.bf16.mxu0 0
        %422 = vmatpush1.bf16.msra.mxu0 %v417
        %423 = vmatprep.subr.bf16.mxu0 0
        %424 = vmatpush1.bf16.msra.mxu0 0
        %425 = vmatprep.subr.bf16.mxu0 0
        %426 = vmatpush1.bf16.msra.mxu0 0
        %427 = vmatprep.subr.bf16.mxu0 0
        %428 = vmatpush1.bf16.msra.mxu0 0
        %429 = vmatprep.subr.bf16.mxu0 0
        %430 = vmatpush1.bf16.msra.mxu0 0
        %431 = vmatprep.subr.bf16.mxu0 0
        %432 = vmatpush1.bf16.msra.mxu0 0
        %433 = vmatprep.subr.bf16.mxu0 0
        %434 = vmatpush1.bf16.msra.mxu0 0
        %435 = vmatprep.subr.bf16.mxu0 0
        %436 = vmatpush1.bf16.msra.mxu0 0
        %437 = vmatprep.subr.bf16.mxu0 0
        %438 = vmatpush1.bf16.msra.mxu0 0
        %439 = vmatprep.subr.bf16.mxu0 0
        %440 = vmatpush1.bf16.msra.mxu0 0
        %441 = vmatprep.subr.bf16.mxu0 0
        %442 = vmatpush1.bf16.msra.mxu0 0
        %443 = vmatprep.subr.bf16.mxu0 0
        %444 = vmatpush1.bf16.msra.mxu0 0
        %445 = vmatprep.subr.bf16.mxu0 0
        %446 = vmatpush1.bf16.msra.mxu0 0
        %447 = vmatprep.subr.bf16.mxu0 0
        %448 = vmatpush1.bf16.msra.mxu0 0
        %449 = vmatprep.subr.bf16.mxu0 0
        %450 = vmatpush1.bf16.msra.mxu0 0
        %451 = vmatprep.mubr.bf16.mxu0 0
        %452 = vmatmul.mubr.bf16.gmra.mrb[0].mxu0 %v414
        %v453 = vpop.f32.mrb[0].mxu0
        %v454 = vadd.f32 %v410, %v453
        %v455 = vpop.f32.mrb[0].mxu0
        %v456 = vpop.f32.mrb[0].mxu0
        %v457 = vpop.f32.mrb[0].mxu0
        %458 = vdwg.mxu0
        %v459 = vld [vmem:[%s5] sm:$0xf]
        %v460 = vld [vmem:[%s6] sm:$0xff]
        %462 = vset.pattern.permute.xlu0 0
        %463 = vperm.xlu0 %462, %v460
        %v464 = vpop.permute.xlu0 %463
        %466 = vrot.lane.b32.xlu0 %v316, 126
        %v467 = vpop.permute.xlu0 %466
        %vm468 = vcmask 31744
        %v470 = vsel %vm468, %v459, 0
        %v473 = vsel %vm322, %v467, 0
        %475 = vmatprep.subr.bf16.mxu0 0
        %476 = vmatpush1.bf16.msra.mxu0 %v473
        %477 = vmatprep.subr.bf16.mxu0 0
        %478 = vmatpush1.bf16.msra.mxu0 0
        %479 = vmatprep.subr.bf16.mxu0 0
        %480 = vmatpush1.bf16.msra.mxu0 0
        %481 = vmatprep.subr.bf16.mxu0 0
        %482 = vmatpush1.bf16.msra.mxu0 0
        %483 = vmatprep.subr.bf16.mxu0 0
        %484 = vmatpush1.bf16.msra.mxu0 0
        %485 = vmatprep.subr.bf16.mxu0 0
        %486 = vmatpush1.bf16.msra.mxu0 0
        %487 = vmatprep.subr.bf16.mxu0 0
        %488 = vmatpush1.bf16.msra.mxu0 0
        %489 = vmatprep.subr.bf16.mxu0 0
        %490 = vmatpush1.bf16.msra.mxu0 0
        %491 = vmatprep.subr.bf16.mxu0 0
        %492 = vmatpush1.bf16.msra.mxu0 0
        %493 = vmatprep.subr.bf16.mxu0 0
        %494 = vmatpush1.bf16.msra.mxu0 0
        %495 = vmatprep.subr.bf16.mxu0 0
        %496 = vmatpush1.bf16.msra.mxu0 0
        %497 = vmatprep.subr.bf16.mxu0 0
        %498 = vmatpush1.bf16.msra.mxu0 0
        %499 = vmatprep.subr.bf16.mxu0 0
        %500 = vmatpush1.bf16.msra.mxu0 0
        %501 = vmatprep.subr.bf16.mxu0 0
        %502 = vmatpush1.bf16.msra.mxu0 0
        %503 = vmatprep.subr.bf16.mxu0 0
        %504 = vmatpush1.bf16.msra.mxu0 0
        %505 = vmatprep.subr.bf16.mxu0 0
        %506 = vmatpush1.bf16.msra.mxu0 0
        %507 = vmatprep.mubr.bf16.mxu0 0
        %508 = vmatmul.mubr.bf16.gmra.mrb[0].mxu0 %v470
        %v509 = vpop.f32.mrb[0].mxu0
        %v510 = vadd.f32 %v464, %v509
        %v511 = vpop.f32.mrb[0].mxu0
        %v512 = vpop.f32.mrb[0].mxu0
        %v513 = vpop.f32.mrb[0].mxu0
        %514 = vdwg.mxu0
        %v515 = vadd.f32 %v454, %v510
        %v516 = vmax.f32 %v515, 0.0
        %vm517 = vcmask 130048
        %518 = vst.msk [vmem:[%s291] sm:$0xff] %vm517, %v516
        %s519 = sand.u32 %s197, 1
        %s520 = scalar_lea.sflag [#allocation3], %s519
        %s521 = sand.u32 %s197, 1
        %s522 = smul.addr %s521, 8
        %s523 = scalar_lea.vmem [#allocation2], %s522
        // Predicated region
        $region49: #{tpu_custom_call.1} parent=47 // pred_check
          %p524 = pneg %p207
        $region50: #{tpu_custom_call.1} parent=47 // pred_check_branch
          %526 = sbr.rel (%p524) target = $region52
        $region51: #{tpu_custom_call.1} parent=47 // pred_region
          %s528 = ssub.s32 128, 128
          %529 = vsyncadd %s520, %s528
          %s530 = sadd.s32 %s26, %s25
          %s531 = smul.addr %s530, 128
          %s532 = scalar_lea.hbm %s7, %s531
          %s534 = sshll.u32 %s523, 4
          %s535 = int_to_ptr.vmem [resolvable:$true] %s534
          %537 = dma.vmem_to_hbm [thread:$0]  %s535, 128, %s532, %s520
        $region52: #{tpu_custom_call.1} parent=47 // pred_fallthru
          _
      $region48: #{tpu_custom_call.1} parent=5 // pred_fallthru
        _
      %p538 = scmp.le.s32.totalorder 2, %s16
      // Predicated region
      $region53: #{tpu_custom_call.1} parent=5 // pred_check
        %p539 = pneg %p538
      $region54: #{tpu_custom_call.1} parent=5 // pred_check_branch
        %541 = sbr.rel (%p539) target = $region56
      $region55: #{tpu_custom_call.1} parent=5 // pred_region
        %s542 = ssub.s32 %s16, 2
        // Predicated region
        $region57: #{tpu_custom_call.1} parent=55 // pred_check
          %p543 = pneg %p213
        $region58: #{tpu_custom_call.1} parent=55 // pred_check_branch
          %545 = sbr.rel (%p543) target = $region60
        $region59: #{tpu_custom_call.1} parent=55 // pred_region
          %s546 = sand.u32 %s198, 1
          %s547 = scalar_lea.sflag [#allocation3], %s546
          %s548 = sand.u32 %s198, 1
          %s549 = smul.addr %s548, 8
          %s550 = scalar_lea.vmem [#allocation2], %s549
          %551 = dma.done %s547, 128
        $region60: #{tpu_custom_call.1} parent=55 // pred_fallthru
          _
      $region56: #{tpu_custom_call.1} parent=5 // pred_fallthru
        _
    $region6: #{tpu_custom_call.1} parent=1 // loop_footer
      %s20 = sadd.s32 1, %s16
    $region7: #{tpu_custom_call.1} parent=1 // loop_footer_branch
      %15 = sbr.rel target = $region3
    $region8: #{tpu_custom_call.1} parent=1 // loop_exit
      _
    %552 = vsyncpa [#allocation3], 1
    %s553 = scalar_lea.sflag [#allocation3], 1
    %554 = vsyncpa %s553, 1

</llo_original>
